<compile_context>
chip_gen: v7x
topology: tpu7x:2x2x1
jax: 0.10.0
libtpu: 0.0.40
codegen_flags: <defaults>
</compile_context>

<pallas_src>
import functools

import jax
import jax.numpy as jnp
import numpy as np
from jax.experimental import pallas as pl
from jax.experimental.pallas import tpu as pltpu


def _round_up(x, m):
    return ((x + m - 1) // m) * m


def _pad_to(x, shape):
    return jnp.pad(x, [(0, t - s) for s, t in zip(x.shape, shape)])


# --------------------------------------------------------------------------- #
# Kernel
# --------------------------------------------------------------------------- #
def update_layer_kernel(
    s_ref, v_ref,
    w_uv_ref, b_uv_ref,
    w1a_ref, w1b_ref, b1_ref,
    w2_ref, b2_ref,
    new_s_ref, new_v_ref,
):
    TN, Fp = s_ref.shape                  # (tile_n, F_padded); v_ref is (tile_n, 3*Fp)
    cdt = w_uv_ref.dtype                  # MXU operand dtype (bf16 or f32)
    f32 = jnp.float32

    s = s_ref[...].astype(f32)            # (TN, Fp)
    v = v_ref[...].astype(f32)            # (TN, 3*Fp) lane-major [x | y | z]
    vx = v[:, 0 * Fp:1 * Fp]              # 128-lane-aligned slices
    vy = v[:, 1 * Fp:2 * Fp]
    vz = v[:, 2 * Fp:3 * Fp]
    # Sublane concat of 8-aligned pieces (layout preserving) -> M = 3*TN matmul.
    v_flat = jnp.concatenate([vx, vy, vz], axis=0)            # (3*TN, Fp)

    # Fused U/V linear: one MXU pass producing [Uv | Vv] along the lane axis.
    uv = jnp.dot(v_flat.astype(cdt), w_uv_ref[...],
                 preferred_element_type=f32) + b_uv_ref[...]
    Uv = uv[:, :Fp]
    Vv = uv[:, Fp:]
    Ux, Uy, Uz = Uv[0:TN], Uv[TN:2 * TN], Uv[2 * TN:3 * TN]    # 8-aligned sublane slices
    Vx, Vy, Vz = Vv[0:TN], Vv[TN:2 * TN], Vv[2 * TN:3 * TN]

    Vv_norm = jnp.sqrt(Vx * Vx + Vy * Vy + Vz * Vz)            # (TN, Fp)
    dot_prod = Ux * Vx + Uy * Vy + Uz * Vz                     # (TN, Fp)

    # MLP layer 1 with split weights (avoids the lane-axis concat of [Vv_norm, s]).
    h = (jnp.dot(Vv_norm.astype(cdt), w1a_ref[...], preferred_element_type=f32)
         + jnp.dot(s.astype(cdt), w1b_ref[...], preferred_element_type=f32)
         + b1_ref[...])
    h = h * jax.nn.sigmoid(h)                                  # SiLU in f32 (EUP)

    out = jnp.dot(h.astype(cdt), w2_ref[...],
                  preferred_element_type=f32) + b2_ref[...]    # (TN, 3*Fp)
    a_vv = out[:, 0 * Fp:1 * Fp]
    a_sv = out[:, 1 * Fp:2 * Fp]
    a_ss = out[:, 2 * Fp:3 * Fp]

    new_s_ref[...] = (s + a_sv * dot_prod + a_ss).astype(new_s_ref.dtype)
    new_v = jnp.concatenate(                                   # lane concat, 128-aligned
        [vx + a_vv * Ux, vy + a_vv * Uy, vz + a_vv * Uz], axis=1)
    new_v_ref[...] = new_v.astype(new_v_ref.dtype)


# --------------------------------------------------------------------------- #
# One-time weight packing (hoisted out of the per-call path)
# --------------------------------------------------------------------------- #
def pack_params(params, mxu_dtype=jnp.bfloat16):
    """Transpose / zero-pad / fuse / cast the Linear weights once.

    Call once and reuse the result: keeps ~7*Fp^2 of pad/concat/cast work and
    its HBM round trips out of every update_layer invocation.
    PyTorch nn.Linear(in, out) weights are (out, in); biases (out,).
    """
    f32 = jnp.float32
    F = params["U_w"].shape[0]
    Fp = _round_up(F, 128)

    # Fused [U | V] weights -> (Fp, 2Fp); biases stay f32 (added post-matmul).
    w_uv = jnp.concatenate(
        [_pad_to(jnp.asarray(params["U_w"]).T, (Fp, Fp)),
         _pad_to(jnp.asarray(params["V_w"]).T, (Fp, Fp))], axis=1).astype(mxu_dtype)
    b_uv = jnp.concatenate(
        [_pad_to(jnp.asarray(params["U_b"])[None, :], (1, Fp)),
         _pad_to(jnp.asarray(params["V_b"])[None, :], (1, Fp))], axis=1).astype(f32)

    # Linear(2F -> F) split into the Vv_norm part and the s part.
    M1_w, M1_b = jnp.asarray(params["M1_w"]), jnp.asarray(params["M1_b"])
    w1a = _pad_to(M1_w[:, :F].T, (Fp, Fp)).astype(mxu_dtype)
    w1b = _pad_to(M1_w[:, F:].T, (Fp, Fp)).astype(mxu_dtype)
    b1 = _pad_to(M1_b[None, :], (1, Fp)).astype(f32)

    # Linear(F -> 3F): pad each F-chunk to Fp so a_vv/a_sv/a_ss stay lane-aligned.
    M2_w, M2_b = jnp.asarray(params["M2_w"]), jnp.asarray(params["M2_b"])
    w2 = jnp.concatenate(
        [_pad_to(M2_w[0 * F:1 * F, :].T, (Fp, Fp)),
         _pad_to(M2_w[1 * F:2 * F, :].T, (Fp, Fp)),
         _pad_to(M2_w[2 * F:3 * F, :].T, (Fp, Fp))], axis=1).astype(mxu_dtype)
    b2 = jnp.concatenate(
        [_pad_to(M2_b[0 * F:1 * F][None, :], (1, Fp)),
         _pad_to(M2_b[1 * F:2 * F][None, :], (1, Fp)),
         _pad_to(M2_b[2 * F:3 * F][None, :], (1, Fp))], axis=1).astype(f32)

    return dict(w_uv=w_uv, b_uv=b_uv, w1a=w1a, w1b=w1b, b1=b1, w2=w2, b2=b2)


# --------------------------------------------------------------------------- #
# Wrapper
# --------------------------------------------------------------------------- #
def _tensorcores_per_chip():
    # v5e/v6e: 1 TensorCore per chip; v7x: 2. Grid "parallel" only shards on v7x.
    try:
        kind = jax.devices()[0].device_kind.lower()
    except Exception:
        return 1
    return 2 if ("v7" in kind or "7x" in kind) else 1


@functools.partial(jax.jit, static_argnames=("tile_n",))
def update_layer(s, v, packed, *, tile_n=None):
    N, F = s.shape
    assert v.shape == (N, 3, F)
    Fp = packed["w_uv"].shape[0]
    assert Fp == _round_up(F, 128), "packed params do not match num_features"

    # ---- generation-aware tile selection ----
    n_cores = _tensorcores_per_chip()
    N8 = _round_up(max(N, 1), 8)
    # Keep the per-step footprint (double-buffered I/O + f32 intermediates,
    # roughly 160*Fp bytes per node row) comfortably inside scoped VMEM.
    vmem_cap = max(8, ((28 << 20) // (160 * Fp)) // 8 * 8)
    tile = 512 if tile_n is None else _round_up(int(tile_n), 8)
    tile = max(8, min(tile, vmem_cap, N8))
    steps = -(-N8 // tile)
    # v7x only: give both TensorCores work when N is big enough that splitting
    # beats one larger matmul (tile stays >= 128 per step).
    if n_cores > 1 and steps == 1 and N8 >= 256:
        steps = 2
    tile = _round_up(-(-N8 // steps), 8)     # balanced tile, <= caps above
    Np = tile * steps

    # ---- activation prep ----
    # When N and F are already aligned this is pure metadata (contiguous
    # reshape) -> no extra HBM traffic; otherwise a one-off zero pad.
    if Np == N and Fp == F:
        s_in = s
        v_in = v.reshape(N, 3 * F)
    else:
        s_in = _pad_to(s, (Np, Fp))
        v_in = _pad_to(v, (Np, 3, Fp)).reshape(Np, 3 * Fp)

    node_s_spec = pl.BlockSpec((tile, Fp), lambda i: (i, 0))
    node_v_spec = pl.BlockSpec((tile, 3 * Fp), lambda i: (i, 0))

    def const_spec(shape):
        # Grid-invariant weight/bias blocks.
        # TODO(synk): on v7x with Fp >= 256, pipeline_mode=pl.Buffered(1) here
        # would reclaim the redundant second weight buffer from VMEM.
        return pl.BlockSpec(shape, lambda i: (0,) * len(shape))

    new_s_p, new_v_p = pl.pallas_call(
        update_layer_kernel,
        out_shape=(
            jax.ShapeDtypeStruct((Np, Fp), s.dtype),
            jax.ShapeDtypeStruct((Np, 3 * Fp), v.dtype),
        ),
        grid_spec=pltpu.PrefetchScalarGridSpec(
            num_scalar_prefetch=0,
            grid=(steps,),
            in_specs=[
                node_s_spec, node_v_spec,
                const_spec(packed["w_uv"].shape), const_spec(packed["b_uv"].shape),
                const_spec(packed["w1a"].shape), const_spec(packed["w1b"].shape),
                const_spec(packed["b1"].shape),
                const_spec(packed["w2"].shape), const_spec(packed["b2"].shape),
            ],
            out_specs=[node_s_spec, node_v_spec],
        ),
        compiler_params=pltpu.CompilerParams(
            dimension_semantics=("parallel",),
            vmem_limit_bytes=48 * 1024 * 1024,
        ),
    )(s_in, v_in, packed["w_uv"], packed["b_uv"], packed["w1a"], packed["w1b"],
      packed["b1"], packed["w2"], packed["b2"])

    new_v_p = new_v_p.reshape(Np, 3, Fp)      # free bitcast
    if Np == N and Fp == F:
        return new_s_p, new_v_p
    return new_s_p[:N, :F], new_v_p[:N, :, :F]


# --------------------------------------------------------------------------- #
# Reference implementation + parameter init (mirrors the PyTorch module)
# --------------------------------------------------------------------------- #
def init_params(key, num_features):
    F = num_features
    ks = jax.random.split(key, 8)

    def lin(kw, kb, fan_in, fan_out):
        bound = 1.0 / np.sqrt(fan_in)
        w = jax.random.uniform(kw, (fan_out, fan_in), jnp.float32, -bound, bound)
        b = jax.random.uniform(kb, (fan_out,), jnp.float32, -bound, bound)
        return w, b

    U_w, U_b = lin(ks[0], ks[1], F, F)
    V_w, V_b = lin(ks[2], ks[3], F, F)
    M1_w, M1_b = lin(ks[4], ks[5], 2 * F, F)
    M2_w, M2_b = lin(ks[6], ks[7], F, 3 * F)
    return dict(U_w=U_w, U_b=U_b, V_w=V_w, V_b=V_b,
                M1_w=M1_w, M1_b=M1_b, M2_w=M2_w, M2_b=M2_b)


def update_layer_ref(s, v, p):
    Uv = jnp.einsum("nij,kj->nik", v, p["U_w"]) + p["U_b"]
    Vv = jnp.einsum("nij,kj->nik", v, p["V_w"]) + p["V_b"]
    Vv_norm = jnp.linalg.norm(Vv, axis=1)
    mlp_in = jnp.concatenate([Vv_norm, s], axis=1)
    h = mlp_in @ p["M1_w"].T + p["M1_b"]
    h = h * jax.nn.sigmoid(h)
    out = h @ p["M2_w"].T + p["M2_b"]
    F = s.shape[1]
    a_vv, a_sv, a_ss = out[:, :F], out[:, F:2 * F], out[:, 2 * F:]
    delta_v = a_vv[:, None, :] * Uv
    dot_prod = jnp.sum(Uv * Vv, axis=1)
    delta_s = a_sv * dot_prod + a_ss
    return s + delta_s, v + delta_v


if __name__ == "__main__":
    key = jax.random.PRNGKey(0)
    k_s, k_v, k_p, k_s2, k_v2 = jax.random.split(key, 5)

    # --- Small, unaligned case (F=32 -> feature-pad path), N=48 nodes. ---
    N, F = 48, 32
    s = jax.random.normal(k_s, (N, F), jnp.float32)
    v = jax.random.normal(k_v, (N, 3, F), jnp.float32)
    params = init_params(k_p, F)
    ref_s, ref_v = update_layer_ref(s, v, params)

    # Exact path (f32 MXU operands), multi-tile grid.
    packed_f32 = pack_params(params, mxu_dtype=jnp.float32)
    out_s, out_v = update_layer(s, v, packed_f32, tile_n=16)
    jax.block_until_ready((out_s, out_v))
    np.testing.assert_allclose(np.asarray(out_s), np.asarray(ref_s), rtol=1e-5, atol=1e-5)
    np.testing.assert_allclose(np.asarray(out_v), np.asarray(ref_v), rtol=1e-5, atol=1e-5)

    # Fast path (bf16 MXU operands, f32 accumulation), auto tiling.
    packed_bf16 = pack_params(params)
    fast_s, fast_v = update_layer(s, v, packed_bf16)
    jax.block_until_ready((fast_s, fast_v))
    np.testing.assert_allclose(np.asarray(fast_s), np.asarray(ref_s), rtol=5e-2, atol=5e-2)
    np.testing.assert_allclose(np.asarray(fast_v), np.asarray(ref_v), rtol=5e-2, atol=5e-2)

    # N not a multiple of 8 (ragged node-pad path), reusing packed weights.
    pad_s, pad_v = update_layer(s[:10], v[:10], packed_bf16)
    jax.block_until_ready((pad_s, pad_v))
    np.testing.assert_allclose(np.asarray(pad_s), np.asarray(ref_s[:10]), rtol=5e-2, atol=5e-2)
    np.testing.assert_allclose(np.asarray(pad_v), np.asarray(ref_v[:10]), rtol=5e-2, atol=5e-2)

    # --- Aligned case (F=128, N=64): zero-copy wrapper path (no pad/transpose). ---
    N2, F2 = 64, 128
    s2 = jax.random.normal(k_s2, (N2, F2), jnp.float32)
    v2 = jax.random.normal(k_v2, (N2, 3, F2), jnp.float32)
    params2 = init_params(jax.random.PRNGKey(1), F2)
    ref_s2, ref_v2 = update_layer_ref(s2, v2, params2)
    packed2 = pack_params(params2, mxu_dtype=jnp.float32)
    out_s2, out_v2 = update_layer(s2, v2, packed2)
    jax.block_until_ready((out_s2, out_v2))
    np.testing.assert_allclose(np.asarray(out_s2), np.asarray(ref_s2), rtol=1e-4, atol=1e-4)
    np.testing.assert_allclose(np.asarray(out_v2), np.asarray(ref_v2), rtol=1e-4, atol=1e-4)

    print("KERNEL_OK")
</pallas_src>

<mosaic_0001>
module attributes {stable_mosaic.version = 11 : i64} {
  func.func @update_layer_kernel(%arg0: i32, %arg1: memref<16x128xf32, #tpu.memory_space<vmem>>, %arg2: memref<16x384xf32, #tpu.memory_space<vmem>>, %arg3: memref<128x256xf32, #tpu.memory_space<vmem>>, %arg4: memref<1x256xf32, #tpu.memory_space<vmem>>, %arg5: memref<128x128xf32, #tpu.memory_space<vmem>>, %arg6: memref<128x128xf32, #tpu.memory_space<vmem>>, %arg7: memref<1x128xf32, #tpu.memory_space<vmem>>, %arg8: memref<128x384xf32, #tpu.memory_space<vmem>>, %arg9: memref<1x384xf32, #tpu.memory_space<vmem>>, %arg10: memref<16x128xf32, #tpu.memory_space<vmem>>, %arg11: memref<16x384xf32, #tpu.memory_space<vmem>>) attributes {dimension_semantics = [#tpu.dimension_semantics<parallel>], iteration_bounds = array<i64: 3>, scalar_prefetch = 0 : i64, scratch_operands = 0 : i64, tpu.core_type = #tpu.core_type<tc>, window_params = [{transform_indices = @transform_0, window_bounds = array<i64: 16, 128>}, {transform_indices = @transform_1, window_bounds = array<i64: 16, 384>}, {pipeline_mode = #tpu.pipeline_mode<synchronous>, transform_indices = @transform_2, window_bounds = array<i64: 128, 256>}, {pipeline_mode = #tpu.pipeline_mode<synchronous>, transform_indices = @transform_3, window_bounds = array<i64: 1, 256>}, {pipeline_mode = #tpu.pipeline_mode<synchronous>, transform_indices = @transform_4, window_bounds = array<i64: 128, 128>}, {pipeline_mode = #tpu.pipeline_mode<synchronous>, transform_indices = @transform_5, window_bounds = array<i64: 128, 128>}, {pipeline_mode = #tpu.pipeline_mode<synchronous>, transform_indices = @transform_6, window_bounds = array<i64: 1, 128>}, {pipeline_mode = #tpu.pipeline_mode<synchronous>, transform_indices = @transform_7, window_bounds = array<i64: 128, 384>}, {pipeline_mode = #tpu.pipeline_mode<synchronous>, transform_indices = @transform_8, window_bounds = array<i64: 1, 384>}, {transform_indices = @transform_9, window_bounds = array<i64: 16, 128>}, {transform_indices = @transform_10, window_bounds = array<i64: 16, 384>}]} {
    %c0 = arith.constant 0 : index
    %c0_0 = arith.constant 0 : index
    %0 = vector.load %arg1[%c0, %c0_0] : memref<16x128xf32, #tpu.memory_space<vmem>>, vector<16x128xf32>
    %c0_1 = arith.constant 0 : index
    %c0_2 = arith.constant 0 : index
    %1 = vector.load %arg2[%c0_1, %c0_2] : memref<16x384xf32, #tpu.memory_space<vmem>>, vector<16x384xf32>
    %2 = vector.extract_strided_slice %1 {offsets = [0, 0], sizes = [16, 128], strides = [1, 1]} : vector<16x384xf32> to vector<16x128xf32>
    %3 = vector.extract_strided_slice %1 {offsets = [0, 128], sizes = [16, 128], strides = [1, 1]} : vector<16x384xf32> to vector<16x128xf32>
    %4 = vector.extract_strided_slice %1 {offsets = [0, 256], sizes = [16, 128], strides = [1, 1]} : vector<16x384xf32> to vector<16x128xf32>
    %5 = tpu.concatenate %2, %3, %4 in 0 : vector<16x128xf32>, vector<16x128xf32>, vector<16x128xf32> -> vector<48x128xf32>
    %c0_3 = arith.constant 0 : index
    %c0_4 = arith.constant 0 : index
    %6 = vector.load %arg3[%c0_3, %c0_4] : memref<128x256xf32, #tpu.memory_space<vmem>>, vector<128x256xf32>
    %cst = arith.constant dense<0.000000e+00> : vector<48x256xf32>
    %7 = tpu.matmul %5, %6, %cst {dimension_numbers = #tpu.dot_dimension_numbers<[1], [0], [0], [1], [0, 0, 1, 1], [], []>} : vector<48x128xf32>, vector<128x256xf32>, vector<48x256xf32> -> vector<48x256xf32>
    %c0_5 = arith.constant 0 : index
    %c0_6 = arith.constant 0 : index
    %8 = vector.load %arg4[%c0_5, %c0_6] : memref<1x256xf32, #tpu.memory_space<vmem>>, vector<1x256xf32>
    %9 = vector.broadcast %8 : vector<1x256xf32> to vector<48x256xf32>
    %10 = arith.addf %7, %9 : vector<48x256xf32>
    %11 = vector.extract_strided_slice %10 {offsets = [0, 0], sizes = [48, 128], strides = [1, 1]} : vector<48x256xf32> to vector<48x128xf32>
    %12 = vector.extract_strided_slice %10 {offsets = [0, 128], sizes = [48, 128], strides = [1, 1]} : vector<48x256xf32> to vector<48x128xf32>
    %13 = vector.extract_strided_slice %11 {offsets = [0, 0], sizes = [16, 128], strides = [1, 1]} : vector<48x128xf32> to vector<16x128xf32>
    %14 = vector.extract_strided_slice %11 {offsets = [16, 0], sizes = [16, 128], strides = [1, 1]} : vector<48x128xf32> to vector<16x128xf32>
    %15 = vector.extract_strided_slice %11 {offsets = [32, 0], sizes = [16, 128], strides = [1, 1]} : vector<48x128xf32> to vector<16x128xf32>
    %16 = vector.extract_strided_slice %12 {offsets = [0, 0], sizes = [16, 128], strides = [1, 1]} : vector<48x128xf32> to vector<16x128xf32>
    %17 = vector.extract_strided_slice %12 {offsets = [16, 0], sizes = [16, 128], strides = [1, 1]} : vector<48x128xf32> to vector<16x128xf32>
    %18 = vector.extract_strided_slice %12 {offsets = [32, 0], sizes = [16, 128], strides = [1, 1]} : vector<48x128xf32> to vector<16x128xf32>
    %19 = arith.mulf %16, %16 : vector<16x128xf32>
    %20 = arith.mulf %17, %17 : vector<16x128xf32>
    %21 = arith.addf %19, %20 : vector<16x128xf32>
    %22 = arith.mulf %18, %18 : vector<16x128xf32>
    %23 = arith.addf %21, %22 : vector<16x128xf32>
    %24 = math.sqrt %23 : vector<16x128xf32>
    %25 = arith.mulf %13, %16 : vector<16x128xf32>
    %26 = arith.mulf %14, %17 : vector<16x128xf32>
    %27 = arith.addf %25, %26 : vector<16x128xf32>
    %28 = arith.mulf %15, %18 : vector<16x128xf32>
    %29 = arith.addf %27, %28 : vector<16x128xf32>
    %c0_7 = arith.constant 0 : index
    %c0_8 = arith.constant 0 : index
    %30 = vector.load %arg5[%c0_7, %c0_8] : memref<128x128xf32, #tpu.memory_space<vmem>>, vector<128x128xf32>
    %cst_9 = arith.constant dense<0.000000e+00> : vector<16x128xf32>
    %31 = tpu.matmul %24, %30, %cst_9 {dimension_numbers = #tpu.dot_dimension_numbers<[1], [0], [0], [1], [0, 0, 1, 1], [], []>} : vector<16x128xf32>, vector<128x128xf32>, vector<16x128xf32> -> vector<16x128xf32>
    %c0_10 = arith.constant 0 : index
    %c0_11 = arith.constant 0 : index
    %32 = vector.load %arg6[%c0_10, %c0_11] : memref<128x128xf32, #tpu.memory_space<vmem>>, vector<128x128xf32>
    %cst_12 = arith.constant dense<0.000000e+00> : vector<16x128xf32>
    %33 = tpu.matmul %0, %32, %cst_12 {dimension_numbers = #tpu.dot_dimension_numbers<[1], [0], [0], [1], [0, 0, 1, 1], [], []>} : vector<16x128xf32>, vector<128x128xf32>, vector<16x128xf32> -> vector<16x128xf32>
    %34 = arith.addf %31, %33 : vector<16x128xf32>
    %c0_13 = arith.constant 0 : index
    %c0_14 = arith.constant 0 : index
    %35 = vector.load %arg7[%c0_13, %c0_14] : memref<1x128xf32, #tpu.memory_space<vmem>>, vector<1x128xf32>
    %36 = vector.broadcast %35 : vector<1x128xf32> to vector<16x128xf32>
    %37 = arith.addf %34, %36 : vector<16x128xf32>
    %38 = arith.negf %37 : vector<16x128xf32>
    %39 = math.exp %38 : vector<16x128xf32>
    %cst_15 = arith.constant 1.000000e+00 : f32
    %40 = vector.broadcast %cst_15 : f32 to vector<16x128xf32>
    %41 = arith.addf %40, %39 : vector<16x128xf32>
    %42 = arith.divf %40, %41 : vector<16x128xf32>
    %43 = arith.mulf %37, %42 : vector<16x128xf32>
    %c0_16 = arith.constant 0 : index
    %c0_17 = arith.constant 0 : index
    %44 = vector.load %arg8[%c0_16, %c0_17] : memref<128x384xf32, #tpu.memory_space<vmem>>, vector<128x384xf32>
    %cst_18 = arith.constant dense<0.000000e+00> : vector<16x384xf32>
    %45 = tpu.matmul %43, %44, %cst_18 {dimension_numbers = #tpu.dot_dimension_numbers<[1], [0], [0], [1], [0, 0, 1, 1], [], []>} : vector<16x128xf32>, vector<128x384xf32>, vector<16x384xf32> -> vector<16x384xf32>
    %c0_19 = arith.constant 0 : index
    %c0_20 = arith.constant 0 : index
    %46 = vector.load %arg9[%c0_19, %c0_20] : memref<1x384xf32, #tpu.memory_space<vmem>>, vector<1x384xf32>
    %47 = vector.broadcast %46 : vector<1x384xf32> to vector<16x384xf32>
    %48 = arith.addf %45, %47 : vector<16x384xf32>
    %49 = vector.extract_strided_slice %48 {offsets = [0, 0], sizes = [16, 128], strides = [1, 1]} : vector<16x384xf32> to vector<16x128xf32>
    %50 = vector.extract_strided_slice %48 {offsets = [0, 128], sizes = [16, 128], strides = [1, 1]} : vector<16x384xf32> to vector<16x128xf32>
    %51 = vector.extract_strided_slice %48 {offsets = [0, 256], sizes = [16, 128], strides = [1, 1]} : vector<16x384xf32> to vector<16x128xf32>
    %52 = arith.mulf %50, %29 : vector<16x128xf32>
    %53 = arith.addf %0, %52 : vector<16x128xf32>
    %54 = arith.addf %53, %51 : vector<16x128xf32>
    %c0_21 = arith.constant 0 : index
    %c0_22 = arith.constant 0 : index
    %55 = vector.load %arg10[%c0_21, %c0_22] : memref<16x128xf32, #tpu.memory_space<vmem>>, vector<16x128xf32>
    tpu.vector_store %arg10[%c0_21, %c0_22], %54 {strides = array<i32>} : memref<16x128xf32, #tpu.memory_space<vmem>>, vector<16x128xf32>,
    %56 = arith.mulf %49, %13 : vector<16x128xf32>
    %57 = arith.addf %2, %56 : vector<16x128xf32>
    %58 = arith.mulf %49, %14 : vector<16x128xf32>
    %59 = arith.addf %3, %58 : vector<16x128xf32>
    %60 = arith.mulf %49, %15 : vector<16x128xf32>
    %61 = arith.addf %4, %60 : vector<16x128xf32>
    %62 = tpu.concatenate %57, %59, %61 in 1 : vector<16x128xf32>, vector<16x128xf32>, vector<16x128xf32> -> vector<16x384xf32>
    %c0_23 = arith.constant 0 : index
    %c0_24 = arith.constant 0 : index
    %63 = vector.load %arg11[%c0_23, %c0_24] : memref<16x384xf32, #tpu.memory_space<vmem>>, vector<16x384xf32>
    tpu.vector_store %arg11[%c0_23, %c0_24], %62 {strides = array<i32>} : memref<16x384xf32, #tpu.memory_space<vmem>>, vector<16x384xf32>,
    return
  }
  func.func @transform_0(%arg0: i32) -> (i32, i32) {
    %c0_i32 = arith.constant 0 : i32
    %c0_i32_0 = arith.constant 0 : i32
    return %arg0, %c0_i32 : i32, i32
  }
  func.func @transform_1(%arg0: i32) -> (i32, i32) {
    %c0_i32 = arith.constant 0 : i32
    %c0_i32_0 = arith.constant 0 : i32
    return %arg0, %c0_i32 : i32, i32
  }
  func.func @transform_2(%arg0: i32) -> (i32, i32) {
    %c0_i32 = arith.constant 0 : i32
    %c0_i32_0 = arith.constant 0 : i32
    %c0_i32_1 = arith.constant 0 : i32
    return %c0_i32, %c0_i32_0 : i32, i32
  }
  func.func @transform_3(%arg0: i32) -> (i32, i32) {
    %c0_i32 = arith.constant 0 : i32
    %c0_i32_0 = arith.constant 0 : i32
    %c0_i32_1 = arith.constant 0 : i32
    return %c0_i32, %c0_i32_0 : i32, i32
  }
  func.func @transform_4(%arg0: i32) -> (i32, i32) {
    %c0_i32 = arith.constant 0 : i32
    %c0_i32_0 = arith.constant 0 : i32
    %c0_i32_1 = arith.constant 0 : i32
    return %c0_i32, %c0_i32_0 : i32, i32
  }
  func.func @transform_5(%arg0: i32) -> (i32, i32) {
    %c0_i32 = arith.constant 0 : i32
    %c0_i32_0 = arith.constant 0 : i32
    %c0_i32_1 = arith.constant 0 : i32
    return %c0_i32, %c0_i32_0 : i32, i32
  }
  func.func @transform_6(%arg0: i32) -> (i32, i32) {
    %c0_i32 = arith.constant 0 : i32
    %c0_i32_0 = arith.constant 0 : i32
    %c0_i32_1 = arith.constant 0 : i32
    return %c0_i32, %c0_i32_0 : i32, i32
  }
  func.func @transform_7(%arg0: i32) -> (i32, i32) {
    %c0_i32 = arith.constant 0 : i32
    %c0_i32_0 = arith.constant 0 : i32
    %c0_i32_1 = arith.constant 0 : i32
    return %c0_i32, %c0_i32_0 : i32, i32
  }
  func.func @transform_8(%arg0: i32) -> (i32, i32) {
    %c0_i32 = arith.constant 0 : i32
    %c0_i32_0 = arith.constant 0 : i32
    %c0_i32_1 = arith.constant 0 : i32
    return %c0_i32, %c0_i32_0 : i32, i32
  }
  func.func @transform_9(%arg0: i32) -> (i32, i32) {
    %c0_i32 = arith.constant 0 : i32
    %c0_i32_0 = arith.constant 0 : i32
    return %arg0, %c0_i32 : i32, i32
  }
  func.func @transform_10(%arg0: i32) -> (i32, i32) {
    %c0_i32 = arith.constant 0 : i32
    %c0_i32_0 = arith.constant 0 : i32
    return %arg0, %c0_i32 : i32, i32
  }
}

</mosaic_0001>

<llo_original>
// kernel: update_layer.1
$region0: #{update_layer.1}
  #allocation0 [shape = 'u32[]', space=smem, size = 0x4, offset = 0x4, fixed_abs, tag = 'smem constant byte address 0x4 - core index']
  #allocation1 [shape = 'u32[144,128]{1,0:T(1,128)}', space=vmem, size = 0x12000, scoped, tag = 'internal scratch']
  %s0 = inlined_call_operand.vmem [shape: f32[48,128], index: 0, kind: input, shape index: {}]
  %s1 = inlined_call_operand.vmem [shape: f32[48,384], index: 1, kind: input, shape index: {}]
  %s2 = inlined_call_operand.vmem [shape: f32[128,256], index: 2, kind: input, shape index: {}]
  %s3 = inlined_call_operand.vmem [shape: f32[1,256], index: 3, kind: input, shape index: {}]
  %s4 = inlined_call_operand.vmem [shape: f32[128,128], index: 4, kind: input, shape index: {}]
  %s5 = inlined_call_operand.vmem [shape: f32[128,128], index: 5, kind: input, shape index: {}]
  %s6 = inlined_call_operand.vmem [shape: f32[1,128], index: 6, kind: input, shape index: {}]
  %s7 = inlined_call_operand.vmem [shape: f32[128,384], index: 7, kind: input, shape index: {}]
  %s8 = inlined_call_operand.vmem [shape: f32[1,384], index: 8, kind: input, shape index: {}]
  %s9 = inlined_call_operand.vmem [shape: f32[48,128], index: 9, kind: output, shape index: {0}]
  %s10 = inlined_call_operand.vmem [shape: f32[48,384], index: 10, kind: output, shape index: {1}]
  %11 = xla_tuple %s9, %s10
  %s12 = sld [smem:[#allocation0]]
  $region77: #{update_layer.1} parent=0
    _
  %s14 = ssub.s32 1, %s12
  %s15 = scalar_select 0, %s14, %s12
  loop: start=0, step=1, limit=5
  $region2: #{update_layer.1} parent=0 // loop_pre_header
    _
  $region3: #{update_layer.1} parent=0 // loop_header
    %s17 = sphi 0, %s21
    %p18 = scmp.ge.s32.totalorder %s17, 5
    %s27 = sphi 0, %s29
    %s30 = sphi 0, %s27
    %s31 = sphi 0, %s30
    %s47 = sphi 0, %s31
    %s53 = sphi 0, %s55
    %s56 = sphi 0, %s53
    %s57 = sphi 0, %s56
    %s73 = sphi 0, %s57
    %s77 = sphi 0, %s77
    %s79 = sphi 0, %s77
    %s80 = sphi 0, %s79
    %s94 = sphi 0, %s80
    %s98 = sphi 0, %s98
    %s100 = sphi 0, %s98
    %s101 = sphi 0, %s100
    %s115 = sphi 0, %s101
    %s119 = sphi 0, %s119
    %s121 = sphi 0, %s119
    %s122 = sphi 0, %s121
    %s136 = sphi 0, %s122
    %s140 = sphi 0, %s140
    %s142 = sphi 0, %s140
    %s143 = sphi 0, %s142
    %s157 = sphi 0, %s143
    %s161 = sphi 0, %s161
    %s163 = sphi 0, %s161
    %s164 = sphi 0, %s163
    %s178 = sphi 0, %s164
    %s182 = sphi 0, %s182
    %s184 = sphi 0, %s182
    %s185 = sphi 0, %s184
    %s199 = sphi 0, %s185
    %s203 = sphi 0, %s203
    %s205 = sphi 0, %s203
    %s206 = sphi 0, %s205
    %s220 = sphi 0, %s206
    %s226 = sphi 0, %s228
    %s229 = sphi 0, %s226
    %s230 = sphi 0, %s229
    %s246 = sphi 0, %s230
    %s252 = sphi 0, %s254
    %s255 = sphi 0, %s252
    %s256 = sphi 0, %s255
    %s272 = sphi 0, %s256
  $region4: #{update_layer.1} parent=0 // loop_header_branch
    %20 = sbr.rel (%p18) target = $region8
  $region5: #{update_layer.1} parent=0 // loop_body
    %s22 = ssub.s32 %s17, 1
    %s23 = ssub.s32 %s17, 2
    %s24 = sadd.s32 %s17, 1
    %s25 = ssub.s32 %s17, %s24
    %p26 = scmp.eq.s32.totalorder %s25, 0
    %s28 = sadd.s32 %s27, 1
    %s29 = scalar_select %p26, %s27, %s28
    %p32 = pneg %p26
    %p33 = scmp.eq.s32.totalorder %s17, 2
    %p34 = por %p32, %p33
    %p35 = scmp.ne.s32.totalorder %s27, %s30
    %p36 = scmp.eq.s32.totalorder %s17, 0
    %p37 = por %p35, %p36
    %p38 = scmp.ne.s32.totalorder %s27, %s30
    %p39 = scmp.eq.s32.totalorder %s22, 2
    %p40 = por %p38, %p39
    %p41 = scmp.ne.s32.totalorder %s30, %s31
    %p42 = scmp.eq.s32.totalorder %s22, 0
    %p43 = por %p41, %p42
    %p44 = scmp.ne.s32.totalorder %s30, %s31
    %p45 = scmp.eq.s32.totalorder %s23, 2
    %p46 = por %p44, %p45
    %p48 = scmp.ne.s32.totalorder %s31, %s47
    %p49 = scmp.eq.s32.totalorder %s23, 0
    %p50 = por %p48, %p49
    %s51 = ssub.s32 %s17, %s24
    %p52 = scmp.eq.s32.totalorder %s51, 0
    %s54 = sadd.s32 %s53, 1
    %s55 = scalar_select %p52, %s53, %s54
    %p58 = pneg %p52
    %p59 = scmp.eq.s32.totalorder %s17, 2
    %p60 = por %p58, %p59
    %p61 = scmp.ne.s32.totalorder %s53, %s56
    %p62 = scmp.eq.s32.totalorder %s17, 0
    %p63 = por %p61, %p62
    %p64 = scmp.ne.s32.totalorder %s53, %s56
    %p65 = scmp.eq.s32.totalorder %s22, 2
    %p66 = por %p64, %p65
    %p67 = scmp.ne.s32.totalorder %s56, %s57
    %p68 = scmp.eq.s32.totalorder %s22, 0
    %p69 = por %p67, %p68
    %p70 = scmp.ne.s32.totalorder %s56, %s57
    %p71 = scmp.eq.s32.totalorder %s23, 2
    %p72 = por %p70, %p71
    %p74 = scmp.ne.s32.totalorder %s57, %s73
    %p75 = scmp.eq.s32.totalorder %s23, 0
    %p76 = por %p74, %p75
    %s78 = sadd.s32 %s77, 1
    %p81 = scmp.eq.s32.totalorder %s17, 2
    %p82 = scmp.ne.s32.totalorder %s77, %s79
    %p83 = scmp.eq.s32.totalorder %s17, 0
    %p84 = por %p82, %p83
    %p85 = scmp.ne.s32.totalorder %s77, %s79
    %p86 = scmp.eq.s32.totalorder %s22, 2
    %p87 = por %p85, %p86
    %p88 = scmp.ne.s32.totalorder %s79, %s80
    %p89 = scmp.eq.s32.totalorder %s22, 0
    %p90 = por %p88, %p89
    %p91 = scmp.ne.s32.totalorder %s79, %s80
    %p92 = scmp.eq.s32.totalorder %s23, 2
    %p93 = por %p91, %p92
    %p95 = scmp.ne.s32.totalorder %s80, %s94
    %p96 = scmp.eq.s32.totalorder %s23, 0
    %p97 = por %p95, %p96
    %s99 = sadd.s32 %s98, 1
    %p102 = scmp.eq.s32.totalorder %s17, 2
    %p103 = scmp.ne.s32.totalorder %s98, %s100
    %p104 = scmp.eq.s32.totalorder %s17, 0
    %p105 = por %p103, %p104
    %p106 = scmp.ne.s32.totalorder %s98, %s100
    %p107 = scmp.eq.s32.totalorder %s22, 2
    %p108 = por %p106, %p107
    %p109 = scmp.ne.s32.totalorder %s100, %s101
    %p110 = scmp.eq.s32.totalorder %s22, 0
    %p111 = por %p109, %p110
    %p112 = scmp.ne.s32.totalorder %s100, %s101
    %p113 = scmp.eq.s32.totalorder %s23, 2
    %p114 = por %p112, %p113
    %p116 = scmp.ne.s32.totalorder %s101, %s115
    %p117 = scmp.eq.s32.totalorder %s23, 0
    %p118 = por %p116, %p117
    %s120 = sadd.s32 %s119, 1
    %p123 = scmp.eq.s32.totalorder %s17, 2
    %p124 = scmp.ne.s32.totalorder %s119, %s121
    %p125 = scmp.eq.s32.totalorder %s17, 0
    %p126 = por %p124, %p125
    %p127 = scmp.ne.s32.totalorder %s119, %s121
    %p128 = scmp.eq.s32.totalorder %s22, 2
    %p129 = por %p127, %p128
    %p130 = scmp.ne.s32.totalorder %s121, %s122
    %p131 = scmp.eq.s32.totalorder %s22, 0
    %p132 = por %p130, %p131
    %p133 = scmp.ne.s32.totalorder %s121, %s122
    %p134 = scmp.eq.s32.totalorder %s23, 2
    %p135 = por %p133, %p134
    %p137 = scmp.ne.s32.totalorder %s122, %s136
    %p138 = scmp.eq.s32.totalorder %s23, 0
    %p139 = por %p137, %p138
    %s141 = sadd.s32 %s140, 1
    %p144 = scmp.eq.s32.totalorder %s17, 2
    %p145 = scmp.ne.s32.totalorder %s140, %s142
    %p146 = scmp.eq.s32.totalorder %s17, 0
    %p147 = por %p145, %p146
    %p148 = scmp.ne.s32.totalorder %s140, %s142
    %p149 = scmp.eq.s32.totalorder %s22, 2
    %p150 = por %p148, %p149
    %p151 = scmp.ne.s32.totalorder %s142, %s143
    %p152 = scmp.eq.s32.totalorder %s22, 0
    %p153 = por %p151, %p152
    %p154 = scmp.ne.s32.totalorder %s142, %s143
    %p155 = scmp.eq.s32.totalorder %s23, 2
    %p156 = por %p154, %p155
    %p158 = scmp.ne.s32.totalorder %s143, %s157
    %p159 = scmp.eq.s32.totalorder %s23, 0
    %p160 = por %p158, %p159
    %s162 = sadd.s32 %s161, 1
    %p165 = scmp.eq.s32.totalorder %s17, 2
    %p166 = scmp.ne.s32.totalorder %s161, %s163
    %p167 = scmp.eq.s32.totalorder %s17, 0
    %p168 = por %p166, %p167
    %p169 = scmp.ne.s32.totalorder %s161, %s163
    %p170 = scmp.eq.s32.totalorder %s22, 2
    %p171 = por %p169, %p170
    %p172 = scmp.ne.s32.totalorder %s163, %s164
    %p173 = scmp.eq.s32.totalorder %s22, 0
    %p174 = por %p172, %p173
    %p175 = scmp.ne.s32.totalorder %s163, %s164
    %p176 = scmp.eq.s32.totalorder %s23, 2
    %p177 = por %p175, %p176
    %p179 = scmp.ne.s32.totalorder %s164, %s178
    %p180 = scmp.eq.s32.totalorder %s23, 0
    %p181 = por %p179, %p180
    %s183 = sadd.s32 %s182, 1
    %p186 = scmp.eq.s32.totalorder %s17, 2
    %p187 = scmp.ne.s32.totalorder %s182, %s184
    %p188 = scmp.eq.s32.totalorder %s17, 0
    %p189 = por %p187, %p188
    %p190 = scmp.ne.s32.totalorder %s182, %s184
    %p191 = scmp.eq.s32.totalorder %s22, 2
    %p192 = por %p190, %p191
    %p193 = scmp.ne.s32.totalorder %s184, %s185
    %p194 = scmp.eq.s32.totalorder %s22, 0
    %p195 = por %p193, %p194
    %p196 = scmp.ne.s32.totalorder %s184, %s185
    %p197 = scmp.eq.s32.totalorder %s23, 2
    %p198 = por %p196, %p197
    %p200 = scmp.ne.s32.totalorder %s185, %s199
    %p201 = scmp.eq.s32.totalorder %s23, 0
    %p202 = por %p200, %p201
    %s204 = sadd.s32 %s203, 1
    %p207 = scmp.eq.s32.totalorder %s17, 2
    %p208 = scmp.ne.s32.totalorder %s203, %s205
    %p209 = scmp.eq.s32.totalorder %s17, 0
    %p210 = por %p208, %p209
    %p211 = scmp.ne.s32.totalorder %s203, %s205
    %p212 = scmp.eq.s32.totalorder %s22, 2
    %p213 = por %p211, %p212
    %p214 = scmp.ne.s32.totalorder %s205, %s206
    %p215 = scmp.eq.s32.totalorder %s22, 0
    %p216 = por %p214, %p215
    %p217 = scmp.ne.s32.totalorder %s205, %s206
    %p218 = scmp.eq.s32.totalorder %s23, 2
    %p219 = por %p217, %p218
    %p221 = scmp.ne.s32.totalorder %s206, %s220
    %p222 = scmp.eq.s32.totalorder %s23, 0
    %p223 = por %p221, %p222
    %s224 = ssub.s32 %s17, %s24
    %p225 = scmp.eq.s32.totalorder %s224, 0
    %s227 = sadd.s32 %s226, 1
    %s228 = scalar_select %p225, %s226, %s227
    %p231 = pneg %p225
    %p232 = scmp.eq.s32.totalorder %s17, 2
    %p233 = por %p231, %p232
    %p234 = scmp.ne.s32.totalorder %s226, %s229
    %p235 = scmp.eq.s32.totalorder %s17, 0
    %p236 = por %p234, %p235
    %p237 = scmp.ne.s32.totalorder %s226, %s229
    %p238 = scmp.eq.s32.totalorder %s22, 2
    %p239 = por %p237, %p238
    %p240 = scmp.ne.s32.totalorder %s229, %s230
    %p241 = scmp.eq.s32.totalorder %s22, 0
    %p242 = por %p240, %p241
    %p243 = scmp.ne.s32.totalorder %s229, %s230
    %p244 = scmp.eq.s32.totalorder %s23, 2
    %p245 = por %p243, %p244
    %p247 = scmp.ne.s32.totalorder %s230, %s246
    %p248 = scmp.eq.s32.totalorder %s23, 0
    %p249 = por %p247, %p248
    %s250 = ssub.s32 %s17, %s24
    %p251 = scmp.eq.s32.totalorder %s250, 0
    %s253 = sadd.s32 %s252, 1
    %s254 = scalar_select %p251, %s252, %s253
    %p257 = pneg %p251
    %p258 = scmp.eq.s32.totalorder %s17, 2
    %p259 = por %p257, %p258
    %p260 = scmp.ne.s32.totalorder %s252, %s255
    %p261 = scmp.eq.s32.totalorder %s17, 0
    %p262 = por %p260, %p261
    %p263 = scmp.ne.s32.totalorder %s252, %s255
    %p264 = scmp.eq.s32.totalorder %s22, 2
    %p265 = por %p263, %p264
    %p266 = scmp.ne.s32.totalorder %s255, %s256
    %p267 = scmp.eq.s32.totalorder %s22, 0
    %p268 = por %p266, %p267
    %p269 = scmp.ne.s32.totalorder %s255, %s256
    %p270 = scmp.eq.s32.totalorder %s23, 2
    %p271 = por %p269, %p270
    %p273 = scmp.ne.s32.totalorder %s256, %s272
    %p274 = scmp.eq.s32.totalorder %s23, 0
    %p275 = por %p273, %p274
    %p276 = scmp.le.s32.totalorder 1, %s17
    %p277 = scmp.lt.s32.totalorder %s17, 4
    %p278 = pnand %p276, %p277
    %p279 = pneg %p278
    // Predicated region
    $region9: #{update_layer.1} parent=5 // pred_check
      _
    $region10: #{update_layer.1} parent=5 // pred_check_branch
      %281 = sbr.rel (%p278) target = $region12
    $region11: #{update_layer.1} parent=5 // pred_region
      %s282 = ssub.s32 %s17, 1
      // Predicated region
      $region13: #{update_layer.1} parent=11 // pred_check
        %p283 = pneg %p90
      $region14: #{update_layer.1} parent=11 // pred_check_branch
        %285 = sbr.rel (%p283) target = $region16
      $region15: #{update_layer.1} parent=11 // pred_region
        _
      $region16: #{update_layer.1} parent=11 // pred_fallthru
        _
      // Predicated region
      $region17: #{update_layer.1} parent=11 // pred_check
        %p286 = pneg %p111
      $region18: #{update_layer.1} parent=11 // pred_check_branch
        %288 = sbr.rel (%p286) target = $region20
      $region19: #{update_layer.1} parent=11 // pred_region
        _
      $region20: #{update_layer.1} parent=11 // pred_fallthru
        _
      // Predicated region
      $region21: #{update_layer.1} parent=11 // pred_check
        %p289 = pneg %p132
      $region22: #{update_layer.1} parent=11 // pred_check_branch
        %291 = sbr.rel (%p289) target = $region24
      $region23: #{update_layer.1} parent=11 // pred_region
        _
      $region24: #{update_layer.1} parent=11 // pred_fallthru
        _
      // Predicated region
      $region25: #{update_layer.1} parent=11 // pred_check
        %p292 = pneg %p153
      $region26: #{update_layer.1} parent=11 // pred_check_branch
        %294 = sbr.rel (%p292) target = $region28
      $region27: #{update_layer.1} parent=11 // pred_region
        _
      $region28: #{update_layer.1} parent=11 // pred_fallthru
        _
      // Predicated region
      $region29: #{update_layer.1} parent=11 // pred_check
        %p295 = pneg %p174
      $region30: #{update_layer.1} parent=11 // pred_check_branch
        %297 = sbr.rel (%p295) target = $region32
      $region31: #{update_layer.1} parent=11 // pred_region
        _
      $region32: #{update_layer.1} parent=11 // pred_fallthru
        _
      // Predicated region
      $region33: #{update_layer.1} parent=11 // pred_check
        %p298 = pneg %p195
      $region34: #{update_layer.1} parent=11 // pred_check_branch
        %300 = sbr.rel (%p298) target = $region36
      $region35: #{update_layer.1} parent=11 // pred_region
        _
      $region36: #{update_layer.1} parent=11 // pred_fallthru
        _
      // Predicated region
      $region37: #{update_layer.1} parent=11 // pred_check
        %p301 = pneg %p216
      $region38: #{update_layer.1} parent=11 // pred_check_branch
        %303 = sbr.rel (%p301) target = $region40
      $region39: #{update_layer.1} parent=11 // pred_region
        _
      $region40: #{update_layer.1} parent=11 // pred_fallthru
        _
    $region12: #{update_layer.1} parent=5 // pred_fallthru
      _
    %p304 = scmp.lt.s32.totalorder %s17, 3
    // Predicated region
    $region41: #{update_layer.1} parent=5 // pred_check
      %p305 = pneg %p304
    $region42: #{update_layer.1} parent=5 // pred_check_branch
      %307 = sbr.rel (%p305) target = $region44
    $region43: #{update_layer.1} parent=5 // pred_region
      // Predicated region
      $region45: #{update_layer.1} parent=43 // pred_check
        %p308 = pneg %p37
      $region46: #{update_layer.1} parent=43 // pred_check_branch
        %310 = sbr.rel (%p308) target = $region48
      $region47: #{update_layer.1} parent=43 // pred_region
        %s311 = smul.u32 2, %s17
        %p312 = scmp.lt.s32.totalorder %s311, 5
        %s313 = scalar_select %p312, %s311, 5
        %s314 = smul.addr %s313, 8
        %s315 = scalar_lea.vmem %s0, %s314
        %s316 = smul.u32 2, %s17
      $region48: #{update_layer.1} parent=43 // pred_fallthru
        _
      // Predicated region
      $region49: #{update_layer.1} parent=43 // pred_check
        %p317 = pneg %p63
      $region50: #{update_layer.1} parent=43 // pred_check_branch
        %319 = sbr.rel (%p317) target = $region52
      $region51: #{update_layer.1} parent=43 // pred_region
        %s320 = smul.u32 2, %s17
        %p321 = scmp.lt.s32.totalorder %s320, 5
        %s322 = scalar_select %p321, %s320, 5
        %s323 = smul.addr %s322, 3
        %s324 = smul.addr %s323, 8
        %s325 = scalar_lea.vmem %s1, %s324
        %s326 = smul.u32 2, %s17
      $region52: #{update_layer.1} parent=43 // pred_fallthru
        _
    $region44: #{update_layer.1} parent=5 // pred_fallthru
      _
    %p327 = scmp.le.s32.totalorder 1, %s17
    %p328 = scmp.lt.s32.totalorder %s17, 4
    %p329 = pnand %p327, %p328
    %p330 = pneg %p329
    // Predicated region
    $region53: #{update_layer.1} parent=5 // pred_check
      _
    $region54: #{update_layer.1} parent=5 // pred_check_branch
      %332 = sbr.rel (%p329) target = $region56
    $region55: #{update_layer.1} parent=5 // pred_region
      %s333 = ssub.s32 %s17, 1
      %s334 = smul.u32 2, %s22
      %p335 = scmp.lt.s32.totalorder %s334, 5
      %s336 = scalar_select %p335, %s334, 5
      %s337 = smul.addr %s336, 8
      %s338 = scalar_lea.vmem %s0, %s337
      %p339 = pneg %p43
      %p340 = pneg %p40
      %s341 = smul.u32 2, %s22
      %p342 = scmp.lt.s32.totalorder %s341, 5
      %s343 = scalar_select %p342, %s341, 5
      %s344 = smul.addr %s343, 3
      %s345 = smul.addr %s344, 8
      %s346 = scalar_lea.vmem %s1, %s345
      %p347 = pneg %p69
      %p348 = pneg %p66
      %p349 = pneg %p90
      %p350 = pneg %p87
      %p351 = pneg %p111
      %p352 = pneg %p108
      %p353 = pneg %p132
      %p354 = pneg %p129
      %p355 = pneg %p153
      %p356 = pneg %p150
      %p357 = pneg %p174
      %p358 = pneg %p171
      %p359 = pneg %p195
      %p360 = pneg %p192
      %p361 = pneg %p216
      %p362 = pneg %p213
      %p363 = pneg %p242
      %p364 = pneg %p239
      %s365 = smul.u32 2, %s22
      %p366 = scmp.lt.s32.totalorder %s365, 5
      %s367 = scalar_select %p366, %s365, 5
      %s368 = smul.addr %s367, 8
      %s369 = scalar_lea.vmem %s9, %s368
      %p370 = pneg %p268
      %p371 = pneg %p265
      %s372 = smul.u32 2, %s22
      %p373 = scmp.lt.s32.totalorder %s372, 5
      %s374 = scalar_select %p373, %s372, 5
      %s375 = smul.addr %s374, 3
      %s376 = smul.addr %s375, 8
      %s377 = scalar_lea.vmem %s10, %s376
      %s378 = smul.u32 2, %s22
      %p379 = scmp.lt.s32.totalorder %s378, 5
      %s380 = scalar_select %p379, %s378, 5
      %s381 = smul.addr %s380, 8
      %s382 = scalar_lea.vmem %s0, %s381
      %s383 = smul.u32 2, %s22
      %s384 = smul.u32 2, %s22
      %p385 = scmp.lt.s32.totalorder %s384, 5
      %s386 = scalar_select %p385, %s384, 5
      %s387 = smul.addr %s386, 3
      %s388 = smul.addr %s387, 8
      %s389 = scalar_lea.vmem %s1, %s388
      %s390 = smul.u32 2, %s22
      %s391 = smul.u32 2, %s22
      %p392 = scmp.lt.s32.totalorder %s391, 5
      %s393 = scalar_select %p392, %s391, 5
      %s394 = smul.addr %s393, 8
      %s395 = scalar_lea.vmem %s9, %s394
      %s396 = smul.u32 2, %s22
      %s397 = smul.u32 2, %s22
      %p398 = scmp.lt.s32.totalorder %s397, 5
      %s399 = scalar_select %p398, %s397, 5
      %s400 = smul.addr %s399, 3
      %s401 = smul.addr %s400, 8
      %s402 = scalar_lea.vmem %s10, %s401
      %s403 = smul.u32 2, %s22
      %v404 = vld [vmem:[%s382] sm:$0xff]
      %v405 = vld [vmem:[%s382 + $0x8] sm:$0xff]
      %v406 = vld [vmem:[%s389] sm:$0xff]
      %v407 = vld [vmem:[%s389 + $0x8] sm:$0xff]
      %v408 = vld [vmem:[%s389 + $0x10] sm:$0xff]
      %v409 = vld [vmem:[%s389 + $0x18] sm:$0xff]
      %v410 = vld [vmem:[%s389 + $0x20] sm:$0xff]
      %v411 = vld [vmem:[%s389 + $0x28] sm:$0xff]
      %v412 = vld [vmem:[%s2] sm:$0xff]
      %v413 = vld [vmem:[%s2 + $0x8] sm:$0xff]
      %v414 = vld [vmem:[%s2 + $0x10] sm:$0xff]
      %v415 = vld [vmem:[%s2 + $0x18] sm:$0xff]
      %v416 = vld [vmem:[%s2 + $0x20] sm:$0xff]
      %v417 = vld [vmem:[%s2 + $0x28] sm:$0xff]
      %v418 = vld [vmem:[%s2 + $0x30] sm:$0xff]
      %v419 = vld [vmem:[%s2 + $0x38] sm:$0xff]
      %v420 = vld [vmem:[%s2 + $0x40] sm:$0xff]
      %v421 = vld [vmem:[%s2 + $0x48] sm:$0xff]
      %v422 = vld [vmem:[%s2 + $0x50] sm:$0xff]
      %v423 = vld [vmem:[%s2 + $0x58] sm:$0xff]
      %v424 = vld [vmem:[%s2 + $0x60] sm:$0xff]
      %v425 = vld [vmem:[%s2 + $0x68] sm:$0xff]
      %v426 = vld [vmem:[%s2 + $0x70] sm:$0xff]
      %v427 = vld [vmem:[%s2 + $0x78] sm:$0xff]
      %v428 = vld [vmem:[%s2 + $0x80] sm:$0xff]
      %v429 = vld [vmem:[%s2 + $0x88] sm:$0xff]
      %v430 = vld [vmem:[%s2 + $0x90] sm:$0xff]
      %v431 = vld [vmem:[%s2 + $0x98] sm:$0xff]
      %v432 = vld [vmem:[%s2 + $0xa0] sm:$0xff]
      %v433 = vld [vmem:[%s2 + $0xa8] sm:$0xff]
      %v434 = vld [vmem:[%s2 + $0xb0] sm:$0xff]
      %v435 = vld [vmem:[%s2 + $0xb8] sm:$0xff]
      %v436 = vld [vmem:[%s2 + $0xc0] sm:$0xff]
      %v437 = vld [vmem:[%s2 + $0xc8] sm:$0xff]
      %v438 = vld [vmem:[%s2 + $0xd0] sm:$0xff]
      %v439 = vld [vmem:[%s2 + $0xd8] sm:$0xff]
      %v440 = vld [vmem:[%s2 + $0xe0] sm:$0xff]
      %v441 = vld [vmem:[%s2 + $0xe8] sm:$0xff]
      %v442 = vld [vmem:[%s2 + $0xf0] sm:$0xff]
      %v443 = vld [vmem:[%s2 + $0xf8] sm:$0xff]
      %v444 = vld [vmem:[%s3] sm:$0x3]
      %v446 = vlaneseq
      %v447 = vshrl.u32 %v446, 7
      %v448 = vsub.s32 0, %v447
      %v449 = vrot.slane %v444, %v448
      %v450 = vlaneseq
      %v451 = vshrl.u32 %v450, 7
      %v452 = vsub.s32 1, %v451
      %v453 = vrot.slane %v444, %v452
      %456 = vmatprep.subr.mxu0 %v413
      %457 = vmatpush1.msra.mxu0 %v412
      %458 = vmatprep.subr.mxu0 %v415
      %459 = vmatpush1.msra.mxu0 %v414
      %460 = vmatprep.subr.mxu0 %v417
      %461 = vmatpush1.msra.mxu0 %v416
      %462 = vmatprep.subr.mxu0 %v419
      %463 = vmatpush1.msra.mxu0 %v418
      %464 = vmatprep.subr.mxu0 %v421
      %465 = vmatpush1.msra.mxu0 %v420
      %466 = vmatprep.subr.mxu0 %v423
      %467 = vmatpush1.msra.mxu0 %v422
      %468 = vmatprep.subr.mxu0 %v425
      %469 = vmatpush1.msra.mxu0 %v424
      %470 = vmatprep.subr.mxu0 %v427
      %471 = vmatpush1.msra.mxu0 %v426
      %472 = vmatprep.subr.mxu0 %v429
      %473 = vmatpush1.msra.mxu0 %v428
      %474 = vmatprep.subr.mxu0 %v431
      %475 = vmatpush1.msra.mxu0 %v430
      %476 = vmatprep.subr.mxu0 %v433
      %477 = vmatpush1.msra.mxu0 %v432
      %478 = vmatprep.subr.mxu0 %v435
      %479 = vmatpush1.msra.mxu0 %v434
      %480 = vmatprep.subr.mxu0 %v437
      %481 = vmatpush1.msra.mxu0 %v436
      %482 = vmatprep.subr.mxu0 %v439
      %483 = vmatpush1.msra.mxu0 %v438
      %484 = vmatprep.subr.mxu0 %v441
      %485 = vmatpush1.msra.mxu0 %v440
      %486 = vmatprep.subr.mxu0 %v443
      %487 = vmatpush1.msra.mxu0 %v442
      %488 = vmatprep.subr.mxu0 0.0
      %489 = vmatpush1.msra.mxu0 0.0
      %490 = vmatprep.subr.mxu0 0.0
      %491 = vmatpush1.msra.mxu0 0.0
      %492 = vmatprep.subr.mxu0 0.0
      %493 = vmatpush1.msra.mxu0 0.0
      %494 = vmatprep.subr.mxu0 0.0
      %495 = vmatpush1.msra.mxu0 0.0
      %496 = vmatprep.subr.mxu0 0.0
      %497 = vmatpush1.msra.mxu0 0.0
      %498 = vmatprep.subr.mxu0 0.0
      %499 = vmatpush1.msra.mxu0 0.0
      %500 = vmatprep.subr.mxu0 0.0
      %501 = vmatpush1.msra.mxu0 0.0
      %502 = vmatprep.subr.mxu0 0.0
      %503 = vmatpush1.msra.mxu0 0.0
      %504 = vmatprep.subr.mxu0 0.0
      %505 = vmatpush1.msra.mxu0 0.0
      %506 = vmatprep.subr.mxu0 0.0
      %507 = vmatpush1.msra.mxu0 0.0
      %508 = vmatprep.subr.mxu0 0.0
      %509 = vmatpush1.msra.mxu0 0.0
      %510 = vmatprep.subr.mxu0 0.0
      %511 = vmatpush1.msra.mxu0 0.0
      %512 = vmatprep.subr.mxu0 0.0
      %513 = vmatpush1.msra.mxu0 0.0
      %514 = vmatprep.subr.mxu0 0.0
      %515 = vmatpush1.msra.mxu0 0.0
      %516 = vmatprep.subr.mxu0 0.0
      %517 = vmatpush1.msra.mxu0 0.0
      %518 = vmatprep.subr.mxu0 0.0
      %519 = vmatpush1.msra.mxu0 0.0
      %520 = vmatprep.mubr.f32.mxu0 0.0
      %521 = vmatmul.mubr.f32.gmra.mrb[0].mxu0 %v406
      %v522 = vpop.f32.mrb[0].mxu0
      %v523 = vadd.f32 %v449, %v522
      %v524 = vpop.f32.mrb[0].mxu0
      %v525 = vadd.f32 %v453, %v524
      %526 = vmatprep.mubr.f32.mxu0 0.0
      %527 = vmatmul.mubr.f32.gmra.mrb[0].mxu0 %v409
      %v528 = vpop.f32.mrb[0].mxu0
      %v529 = vadd.f32 %v449, %v528
      %v530 = vpop.f32.mrb[0].mxu0
      %v531 = vadd.f32 %v453, %v530
      %532 = vmatprep.mubr.f32.mxu0 0.0
      %533 = vmatmul.mubr.f32.gmra.mrb[0].mxu0 %v407
      %v534 = vpop.f32.mrb[0].mxu0
      %v535 = vadd.f32 %v449, %v534
      %v536 = vpop.f32.mrb[0].mxu0
      %v537 = vadd.f32 %v453, %v536
      %538 = vmatprep.mubr.f32.mxu0 0.0
      %539 = vmatmul.mubr.f32.gmra.mrb[0].mxu0 %v410
      %v540 = vpop.f32.mrb[0].mxu0
      %v541 = vadd.f32 %v449, %v540
      %v542 = vpop.f32.mrb[0].mxu0
      %v543 = vadd.f32 %v453, %v542
      %544 = vmatprep.mubr.f32.mxu0 0.0
      %545 = vmatmul.mubr.f32.gmra.mrb[0].mxu0 %v408
      %v546 = vpop.f32.mrb[0].mxu0
      %v547 = vadd.f32 %v449, %v546
      %v548 = vpop.f32.mrb[0].mxu0
      %v549 = vadd.f32 %v453, %v548
      %550 = vmatprep.mubr.f32.mxu0 0.0
      %551 = vmatmul.mubr.f32.gmra.mrb[0].mxu0 %v411
      %v552 = vpop.f32.mrb[0].mxu0
      %v553 = vadd.f32 %v449, %v552
      %v554 = vpop.f32.mrb[0].mxu0
      %v555 = vadd.f32 %v453, %v554
      %556 = vdwg.mxu0
      %v557 = vmul.f32 %v525, %v525
      %v558 = vmul.f32 %v531, %v531
      %v559 = vmul.f32 %v537, %v537
      %v560 = vmul.f32 %v543, %v543
      %v561 = vadd.f32 %v557, %v559
      %v562 = vadd.f32 %v558, %v560
      %v563 = vmul.f32 %v549, %v549
      %v564 = vmul.f32 %v555, %v555
      %v565 = vadd.f32 %v561, %v563
      %v566 = vadd.f32 %v562, %v564
      %v567 = vrsqrt.pop %v565
      %v568 = vmul.f32 %v565, %v567
      %vm569 = vcmp.eq.f32.partialorder %v565, inf
      %v570 = vsel %vm569, %v565, %v568
      %vm571 = vcmp.eq.f32.partialorder %v565, 0.0
      %v572 = vand.u32 %v565, 2147483648
      %v573 = vsel %vm571, %v572, %v570
      %v574 = vrsqrt.pop %v566
      %v575 = vmul.f32 %v566, %v574
      %vm576 = vcmp.eq.f32.partialorder %v566, inf
      %v577 = vsel %vm576, %v566, %v575
      %vm578 = vcmp.eq.f32.partialorder %v566, 0.0
      %v579 = vand.u32 %v566, 2147483648
      %v580 = vsel %vm578, %v579, %v577
      %v581 = vmul.f32 %v523, %v525
      %v582 = vmul.f32 %v529, %v531
      %v583 = vmul.f32 %v535, %v537
      %v584 = vmul.f32 %v541, %v543
      %v585 = vadd.f32 %v581, %v583
      %v586 = vadd.f32 %v582, %v584
      %v587 = vmul.f32 %v547, %v549
      %v588 = vmul.f32 %v553, %v555
      %v589 = vadd.f32 %v585, %v587
      %v590 = vadd.f32 %v586, %v588
      %v591 = vld [vmem:[%s4] sm:$0xff]
      %v592 = vld [vmem:[%s4 + $0x8] sm:$0xff]
      %v593 = vld [vmem:[%s4 + $0x10] sm:$0xff]
      %v594 = vld [vmem:[%s4 + $0x18] sm:$0xff]
      %v595 = vld [vmem:[%s4 + $0x20] sm:$0xff]
      %v596 = vld [vmem:[%s4 + $0x28] sm:$0xff]
      %v597 = vld [vmem:[%s4 + $0x30] sm:$0xff]
      %v598 = vld [vmem:[%s4 + $0x38] sm:$0xff]
      %v599 = vld [vmem:[%s4 + $0x40] sm:$0xff]
      %v600 = vld [vmem:[%s4 + $0x48] sm:$0xff]
      %v601 = vld [vmem:[%s4 + $0x50] sm:$0xff]
      %v602 = vld [vmem:[%s4 + $0x58] sm:$0xff]
      %v603 = vld [vmem:[%s4 + $0x60] sm:$0xff]
      %v604 = vld [vmem:[%s4 + $0x68] sm:$0xff]
      %v605 = vld [vmem:[%s4 + $0x70] sm:$0xff]
      %v606 = vld [vmem:[%s4 + $0x78] sm:$0xff]
      %v607 = vld [vmem:[%s5] sm:$0xff]
      %v608 = vld [vmem:[%s5 + $0x8] sm:$0xff]
      %v609 = vld [vmem:[%s5 + $0x10] sm:$0xff]
      %v610 = vld [vmem:[%s5 + $0x18] sm:$0xff]
      %v611 = vld [vmem:[%s5 + $0x20] sm:$0xff]
      %v612 = vld [vmem:[%s5 + $0x28] sm:$0xff]
      %v613 = vld [vmem:[%s5 + $0x30] sm:$0xff]
      %v614 = vld [vmem:[%s5 + $0x38] sm:$0xff]
      %v615 = vld [vmem:[%s5 + $0x40] sm:$0xff]
      %v616 = vld [vmem:[%s5 + $0x48] sm:$0xff]
      %v617 = vld [vmem:[%s5 + $0x50] sm:$0xff]
      %v618 = vld [vmem:[%s5 + $0x58] sm:$0xff]
      %v619 = vld [vmem:[%s5 + $0x60] sm:$0xff]
      %v620 = vld [vmem:[%s5 + $0x68] sm:$0xff]
      %v621 = vld [vmem:[%s5 + $0x70] sm:$0xff]
      %v622 = vld [vmem:[%s5 + $0x78] sm:$0xff]
      %623 = vmatprep.subr.mxu0 0.0
      %624 = vmatpush1.msra.mxu0 %v607
      %625 = vmatprep.subr.mxu0 0.0
      %626 = vmatpush1.msra.mxu0 %v608
      %627 = vmatprep.subr.mxu0 0.0
      %628 = vmatpush1.msra.mxu0 %v609
      %629 = vmatprep.subr.mxu0 0.0
      %630 = vmatpush1.msra.mxu0 %v610
      %631 = vmatprep.subr.mxu0 0.0
      %632 = vmatpush1.msra.mxu0 %v611
      %633 = vmatprep.subr.mxu0 0.0
      %634 = vmatpush1.msra.mxu0 %v612
      %635 = vmatprep.subr.mxu0 0.0
      %636 = vmatpush1.msra.mxu0 %v613
      %637 = vmatprep.subr.mxu0 0.0
      %638 = vmatpush1.msra.mxu0 %v614
      %639 = vmatprep.subr.mxu0 0.0
      %640 = vmatpush1.msra.mxu0 %v615
      %641 = vmatprep.subr.mxu0 0.0
      %642 = vmatpush1.msra.mxu0 %v616
      %643 = vmatprep.subr.mxu0 0.0
      %644 = vmatpush1.msra.mxu0 %v617
      %645 = vmatprep.subr.mxu0 0.0
      %646 = vmatpush1.msra.mxu0 %v618
      %647 = vmatprep.subr.mxu0 0.0
      %648 = vmatpush1.msra.mxu0 %v619
      %649 = vmatprep.subr.mxu0 0.0
      %650 = vmatpush1.msra.mxu0 %v620
      %651 = vmatprep.subr.mxu0 0.0
      %652 = vmatpush1.msra.mxu0 %v621
      %653 = vmatprep.subr.mxu0 0.0
      %654 = vmatpush1.msra.mxu0 %v622
      %655 = vmatprep.subr.mxu0 0.0
      %656 = vmatpush1.msra.mxu0 0.0
      %657 = vmatprep.subr.mxu0 0.0
      %658 = vmatpush1.msra.mxu0 0.0
      %659 = vmatprep.subr.mxu0 0.0
      %660 = vmatpush1.msra.mxu0 0.0
      %661 = vmatprep.subr.mxu0 0.0
      %662 = vmatpush1.msra.mxu0 0.0
      %663 = vmatprep.subr.mxu0 0.0
      %664 = vmatpush1.msra.mxu0 0.0
      %665 = vmatprep.subr.mxu0 0.0
      %666 = vmatpush1.msra.mxu0 0.0
      %667 = vmatprep.subr.mxu0 0.0
      %668 = vmatpush1.msra.mxu0 0.0
      %669 = vmatprep.subr.mxu0 0.0
      %670 = vmatpush1.msra.mxu0 0.0
      %671 = vmatprep.subr.mxu0 0.0
      %672 = vmatpush1.msra.mxu0 0.0
      %673 = vmatprep.subr.mxu0 0.0
      %674 = vmatpush1.msra.mxu0 0.0
      %675 = vmatprep.subr.mxu0 0.0
      %676 = vmatpush1.msra.mxu0 0.0
      %677 = vmatprep.subr.mxu0 0.0
      %678 = vmatpush1.msra.mxu0 0.0
      %679 = vmatprep.subr.mxu0 0.0
      %680 = vmatpush1.msra.mxu0 0.0
      %681 = vmatprep.subr.mxu0 0.0
      %682 = vmatpush1.msra.mxu0 0.0
      %683 = vmatprep.subr.mxu0 0.0
      %684 = vmatpush1.msra.mxu0 0.0
      %685 = vmatprep.subr.mxu0 0.0
      %686 = vmatpush1.msra.mxu0 0.0
      %687 = vmatprep.mubr.f32.mxu0 0.0
      %688 = vmatmul.mubr.f32.gmra.mrb[0].mxu0 %v404
      %v689 = vpop.f32.mrb[0].mxu0
      %v690 = vadd.f32 0.0, %v689
      %v691 = vpop.f32.mrb[0].mxu0
      %692 = vmatprep.mubr.f32.mxu0 0.0
      %693 = vmatmul.mubr.f32.gmra.mrb[0].mxu0 %v405
      %v694 = vpop.f32.mrb[0].mxu0
      %v695 = vadd.f32 0.0, %v694
      %v696 = vpop.f32.mrb[0].mxu0
      %697 = vdwg.mxu0
      %698 = vmatprep.subr.mxu0 0.0
      %699 = vmatpush1.msra.mxu0 %v591
      %700 = vmatprep.subr.mxu0 0.0
      %701 = vmatpush1.msra.mxu0 %v592
      %702 = vmatprep.subr.mxu0 0.0
      %703 = vmatpush1.msra.mxu0 %v593
      %704 = vmatprep.subr.mxu0 0.0
      %705 = vmatpush1.msra.mxu0 %v594
      %706 = vmatprep.subr.mxu0 0.0
      %707 = vmatpush1.msra.mxu0 %v595
      %708 = vmatprep.subr.mxu0 0.0
      %709 = vmatpush1.msra.mxu0 %v596
      %710 = vmatprep.subr.mxu0 0.0
      %711 = vmatpush1.msra.mxu0 %v597
      %712 = vmatprep.subr.mxu0 0.0
      %713 = vmatpush1.msra.mxu0 %v598
      %714 = vmatprep.subr.mxu0 0.0
      %715 = vmatpush1.msra.mxu0 %v599
      %716 = vmatprep.subr.mxu0 0.0
      %717 = vmatpush1.msra.mxu0 %v600
      %718 = vmatprep.subr.mxu0 0.0
      %719 = vmatpush1.msra.mxu0 %v601
      %720 = vmatprep.subr.mxu0 0.0
      %721 = vmatpush1.msra.mxu0 %v602
      %722 = vmatprep.subr.mxu0 0.0
      %723 = vmatpush1.msra.mxu0 %v603
      %724 = vmatprep.subr.mxu0 0.0
      %725 = vmatpush1.msra.mxu0 %v604
      %726 = vmatprep.subr.mxu0 0.0
      %727 = vmatpush1.msra.mxu0 %v605
      %728 = vmatprep.subr.mxu0 0.0
      %729 = vmatpush1.msra.mxu0 %v606
      %730 = vmatprep.subr.mxu0 0.0
      %731 = vmatpush1.msra.mxu0 0.0
      %732 = vmatprep.subr.mxu0 0.0
      %733 = vmatpush1.msra.mxu0 0.0
      %734 = vmatprep.subr.mxu0 0.0
      %735 = vmatpush1.msra.mxu0 0.0
      %736 = vmatprep.subr.mxu0 0.0
      %737 = vmatpush1.msra.mxu0 0.0
      %738 = vmatprep.subr.mxu0 0.0
      %739 = vmatpush1.msra.mxu0 0.0
      %740 = vmatprep.subr.mxu0 0.0
      %741 = vmatpush1.msra.mxu0 0.0
      %742 = vmatprep.subr.mxu0 0.0
      %743 = vmatpush1.msra.mxu0 0.0
      %744 = vmatprep.subr.mxu0 0.0
      %745 = vmatpush1.msra.mxu0 0.0
      %746 = vmatprep.subr.mxu0 0.0
      %747 = vmatpush1.msra.mxu0 0.0
      %748 = vmatprep.subr.mxu0 0.0
      %749 = vmatpush1.msra.mxu0 0.0
      %750 = vmatprep.subr.mxu0 0.0
      %751 = vmatpush1.msra.mxu0 0.0
      %752 = vmatprep.subr.mxu0 0.0
      %753 = vmatpush1.msra.mxu0 0.0
      %754 = vmatprep.subr.mxu0 0.0
      %755 = vmatpush1.msra.mxu0 0.0
      %756 = vmatprep.subr.mxu0 0.0
      %757 = vmatpush1.msra.mxu0 0.0
      %758 = vmatprep.subr.mxu0 0.0
      %759 = vmatpush1.msra.mxu0 0.0
      %760 = vmatprep.subr.mxu0 0.0
      %761 = vmatpush1.msra.mxu0 0.0
      %762 = vmatprep.mubr.f32.mxu0 0.0
      %763 = vmatmul.mubr.f32.gmra.mrb[0].mxu0 %v573
      %v764 = vpop.f32.mrb[0].mxu0
      %v765 = vadd.f32 %v690, %v764
      %v766 = vpop.f32.mrb[0].mxu0
      %767 = vmatprep.mubr.f32.mxu0 0.0
      %768 = vmatmul.mubr.f32.gmra.mrb[0].mxu0 %v580
      %v769 = vpop.f32.mrb[0].mxu0
      %v770 = vadd.f32 %v695, %v769
      %v771 = vpop.f32.mrb[0].mxu0
      %772 = vdwg.mxu0
      %v773 = vld [vmem:[%s6] sm:$0x1]
      %v775 = vlaneseq
      %v776 = vshrl.u32 %v775, 7
      %v777 = vsub.s32 0, %v776
      %v778 = vrot.slane %v773, %v777
      %v780 = vadd.f32 %v765, %v778
      %v781 = vadd.f32 %v770, %v778
      %v782 = vxor.u32 %v780, 2147483648
      %v783 = vxor.u32 %v781, 2147483648
      %v784 = vmul.f32 %v782, 1.442695
      %v785 = vpow.pop %v784
      %v786 = vmul.f32 %v783, 1.442695
      %v787 = vpow.pop %v786
      %v788 = vadd.f32 %v785, 1.0
      %v789 = vadd.f32 %v787, 1.0
      %v790 = vrcp.pop %v788
      %v791 = vmul.f32 1.0, %v790
      %v792 = vrcp.pop %v789
      %v793 = vmul.f32 1.0, %v792
      %v794 = vmul.f32 %v780, %v791
      %v795 = vmul.f32 %v781, %v793
      %v796 = vld [vmem:[%s7] sm:$0xff]
      %v797 = vld [vmem:[%s7 + $0x8] sm:$0xff]
      %v798 = vld [vmem:[%s7 + $0x10] sm:$0xff]
      %v799 = vld [vmem:[%s7 + $0x18] sm:$0xff]
      %v800 = vld [vmem:[%s7 + $0x20] sm:$0xff]
      %v801 = vld [vmem:[%s7 + $0x28] sm:$0xff]
      %v802 = vld [vmem:[%s7 + $0x30] sm:$0xff]
      %v803 = vld [vmem:[%s7 + $0x38] sm:$0xff]
      %v804 = vld [vmem:[%s7 + $0x40] sm:$0xff]
      %v805 = vld [vmem:[%s7 + $0x48] sm:$0xff]
      %v806 = vld [vmem:[%s7 + $0x50] sm:$0xff]
      %v807 = vld [vmem:[%s7 + $0x58] sm:$0xff]
      %v808 = vld [vmem:[%s7 + $0x60] sm:$0xff]
      %v809 = vld [vmem:[%s7 + $0x68] sm:$0xff]
      %v810 = vld [vmem:[%s7 + $0x70] sm:$0xff]
      %v811 = vld [vmem:[%s7 + $0x78] sm:$0xff]
      %v812 = vld [vmem:[%s7 + $0x80] sm:$0xff]
      %v813 = vld [vmem:[%s7 + $0x88] sm:$0xff]
      %v814 = vld [vmem:[%s7 + $0x90] sm:$0xff]
      %v815 = vld [vmem:[%s7 + $0x98] sm:$0xff]
      %v816 = vld [vmem:[%s7 + $0xa0] sm:$0xff]
      %v817 = vld [vmem:[%s7 + $0xa8] sm:$0xff]
      %v818 = vld [vmem:[%s7 + $0xb0] sm:$0xff]
      %v819 = vld [vmem:[%s7 + $0xb8] sm:$0xff]
      %v820 = vld [vmem:[%s7 + $0xc0] sm:$0xff]
      %v821 = vld [vmem:[%s7 + $0xc8] sm:$0xff]
      %v822 = vld [vmem:[%s7 + $0xd0] sm:$0xff]
      %v823 = vld [vmem:[%s7 + $0xd8] sm:$0xff]
      %v824 = vld [vmem:[%s7 + $0xe0] sm:$0xff]
      %v825 = vld [vmem:[%s7 + $0xe8] sm:$0xff]
      %v826 = vld [vmem:[%s7 + $0xf0] sm:$0xff]
      %v827 = vld [vmem:[%s7 + $0xf8] sm:$0xff]
      %v828 = vld [vmem:[%s7 + $0x100] sm:$0xff]
      %v829 = vld [vmem:[%s7 + $0x108] sm:$0xff]
      %v830 = vld [vmem:[%s7 + $0x110] sm:$0xff]
      %v831 = vld [vmem:[%s7 + $0x118] sm:$0xff]
      %v832 = vld [vmem:[%s7 + $0x120] sm:$0xff]
      %v833 = vld [vmem:[%s7 + $0x128] sm:$0xff]
      %v834 = vld [vmem:[%s7 + $0x130] sm:$0xff]
      %v835 = vld [vmem:[%s7 + $0x138] sm:$0xff]
      %v836 = vld [vmem:[%s7 + $0x140] sm:$0xff]
      %v837 = vld [vmem:[%s7 + $0x148] sm:$0xff]
      %v838 = vld [vmem:[%s7 + $0x150] sm:$0xff]
      %v839 = vld [vmem:[%s7 + $0x158] sm:$0xff]
      %v840 = vld [vmem:[%s7 + $0x160] sm:$0xff]
      %v841 = vld [vmem:[%s7 + $0x168] sm:$0xff]
      %v842 = vld [vmem:[%s7 + $0x170] sm:$0xff]
      %v843 = vld [vmem:[%s7 + $0x178] sm:$0xff]
      %v844 = vld [vmem:[%s8] sm:$0x7]
      %v846 = vlaneseq
      %v847 = vshrl.u32 %v846, 7
      %v848 = vsub.s32 0, %v847
      %v849 = vrot.slane %v844, %v848
      %v850 = vlaneseq
      %v851 = vshrl.u32 %v850, 7
      %v852 = vsub.s32 1, %v851
      %v853 = vrot.slane %v844, %v852
      %v854 = vlaneseq
      %v855 = vshrl.u32 %v854, 7
      %v856 = vsub.s32 2, %v855
      %v857 = vrot.slane %v844, %v856
      %861 = vmatprep.subr.mxu0 %v797
      %862 = vmatpush1.msra.mxu0 %v796
      %863 = vmatprep.subr.mxu0 %v800
      %864 = vmatpush1.msra.mxu0 %v799
      %865 = vmatprep.subr.mxu0 %v803
      %866 = vmatpush1.msra.mxu0 %v802
      %867 = vmatprep.subr.mxu0 %v806
      %868 = vmatpush1.msra.mxu0 %v805
      %869 = vmatprep.subr.mxu0 %v809
      %870 = vmatpush1.msra.mxu0 %v808
      %871 = vmatprep.subr.mxu0 %v812
      %872 = vmatpush1.msra.mxu0 %v811
      %873 = vmatprep.subr.mxu0 %v815
      %874 = vmatpush1.msra.mxu0 %v814
      %875 = vmatprep.subr.mxu0 %v818
      %876 = vmatpush1.msra.mxu0 %v817
      %877 = vmatprep.subr.mxu0 %v821
      %878 = vmatpush1.msra.mxu0 %v820
      %879 = vmatprep.subr.mxu0 %v824
      %880 = vmatpush1.msra.mxu0 %v823
      %881 = vmatprep.subr.mxu0 %v827
      %882 = vmatpush1.msra.mxu0 %v826
      %883 = vmatprep.subr.mxu0 %v830
      %884 = vmatpush1.msra.mxu0 %v829
      %885 = vmatprep.subr.mxu0 %v833
      %886 = vmatpush1.msra.mxu0 %v832
      %887 = vmatprep.subr.mxu0 %v836
      %888 = vmatpush1.msra.mxu0 %v835
      %889 = vmatprep.subr.mxu0 %v839
      %890 = vmatpush1.msra.mxu0 %v838
      %891 = vmatprep.subr.mxu0 %v842
      %892 = vmatpush1.msra.mxu0 %v841
      %893 = vmatprep.subr.mxu0 0.0
      %894 = vmatpush1.msra.mxu0 0.0
      %895 = vmatprep.subr.mxu0 0.0
      %896 = vmatpush1.msra.mxu0 0.0
      %897 = vmatprep.subr.mxu0 0.0
      %898 = vmatpush1.msra.mxu0 0.0
      %899 = vmatprep.subr.mxu0 0.0
      %900 = vmatpush1.msra.mxu0 0.0
      %901 = vmatprep.subr.mxu0 0.0
      %902 = vmatpush1.msra.mxu0 0.0
      %903 = vmatprep.subr.mxu0 0.0
      %904 = vmatpush1.msra.mxu0 0.0
      %905 = vmatprep.subr.mxu0 0.0
      %906 = vmatpush1.msra.mxu0 0.0
      %907 = vmatprep.subr.mxu0 0.0
      %908 = vmatpush1.msra.mxu0 0.0
      %909 = vmatprep.subr.mxu0 0.0
      %910 = vmatpush1.msra.mxu0 0.0
      %911 = vmatprep.subr.mxu0 0.0
      %912 = vmatpush1.msra.mxu0 0.0
      %913 = vmatprep.subr.mxu0 0.0
      %914 = vmatpush1.msra.mxu0 0.0
      %915 = vmatprep.subr.mxu0 0.0
      %916 = vmatpush1.msra.mxu0 0.0
      %917 = vmatprep.subr.mxu0 0.0
      %918 = vmatpush1.msra.mxu0 0.0
      %919 = vmatprep.subr.mxu0 0.0
      %920 = vmatpush1.msra.mxu0 0.0
      %921 = vmatprep.subr.mxu0 0.0
      %922 = vmatpush1.msra.mxu0 0.0
      %923 = vmatprep.subr.mxu0 0.0
      %924 = vmatpush1.msra.mxu0 0.0
      %925 = vmatprep.mubr.f32.mxu0 0.0
      %926 = vmatmul.mubr.f32.gmra.mrb[0].mxu0 %v794
      %v927 = vpop.f32.mrb[0].mxu0
      %v928 = vadd.f32 %v849, %v927
      %v929 = vpop.f32.mrb[0].mxu0
      %v930 = vadd.f32 %v853, %v929
      %931 = vmatprep.mubr.f32.mxu0 0.0
      %932 = vmatmul.mubr.f32.gmra.mrb[0].mxu0 %v795
      %v933 = vpop.f32.mrb[0].mxu0
      %v934 = vadd.f32 %v849, %v933
      %v935 = vpop.f32.mrb[0].mxu0
      %v936 = vadd.f32 %v853, %v935
      %937 = vdwg.mxu0
      %938 = vmatprep.subr.mxu0 0.0
      %939 = vmatpush1.msra.mxu0 %v798
      %940 = vmatprep.subr.mxu0 0.0
      %941 = vmatpush1.msra.mxu0 %v801
      %942 = vmatprep.subr.mxu0 0.0
      %943 = vmatpush1.msra.mxu0 %v804
      %944 = vmatprep.subr.mxu0 0.0
      %945 = vmatpush1.msra.mxu0 %v807
      %946 = vmatprep.subr.mxu0 0.0
      %947 = vmatpush1.msra.mxu0 %v810
      %948 = vmatprep.subr.mxu0 0.0
      %949 = vmatpush1.msra.mxu0 %v813
      %950 = vmatprep.subr.mxu0 0.0
      %951 = vmatpush1.msra.mxu0 %v816
      %952 = vmatprep.subr.mxu0 0.0
      %953 = vmatpush1.msra.mxu0 %v819
      %954 = vmatprep.subr.mxu0 0.0
      %955 = vmatpush1.msra.mxu0 %v822
      %956 = vmatprep.subr.mxu0 0.0
      %957 = vmatpush1.msra.mxu0 %v825
      %958 = vmatprep.subr.mxu0 0.0
      %959 = vmatpush1.msra.mxu0 %v828
      %960 = vmatprep.subr.mxu0 0.0
      %961 = vmatpush1.msra.mxu0 %v831
      %962 = vmatprep.subr.mxu0 0.0
      %963 = vmatpush1.msra.mxu0 %v834
      %964 = vmatprep.subr.mxu0 0.0
      %965 = vmatpush1.msra.mxu0 %v837
      %966 = vmatprep.subr.mxu0 0.0
      %967 = vmatpush1.msra.mxu0 %v840
      %968 = vmatprep.subr.mxu0 0.0
      %969 = vmatpush1.msra.mxu0 %v843
      %970 = vmatprep.subr.mxu0 0.0
      %971 = vmatpush1.msra.mxu0 0.0
      %972 = vmatprep.subr.mxu0 0.0
      %973 = vmatpush1.msra.mxu0 0.0
      %974 = vmatprep.subr.mxu0 0.0
      %975 = vmatpush1.msra.mxu0 0.0
      %976 = vmatprep.subr.mxu0 0.0
      %977 = vmatpush1.msra.mxu0 0.0
      %978 = vmatprep.subr.mxu0 0.0
      %979 = vmatpush1.msra.mxu0 0.0
      %980 = vmatprep.subr.mxu0 0.0
      %981 = vmatpush1.msra.mxu0 0.0
      %982 = vmatprep.subr.mxu0 0.0
      %983 = vmatpush1.msra.mxu0 0.0
      %984 = vmatprep.subr.mxu0 0.0
      %985 = vmatpush1.msra.mxu0 0.0
      %986 = vmatprep.subr.mxu0 0.0
      %987 = vmatpush1.msra.mxu0 0.0
      %988 = vmatprep.subr.mxu0 0.0
      %989 = vmatpush1.msra.mxu0 0.0
      %990 = vmatprep.subr.mxu0 0.0
      %991 = vmatpush1.msra.mxu0 0.0
      %992 = vmatprep.subr.mxu0 0.0
      %993 = vmatpush1.msra.mxu0 0.0
      %994 = vmatprep.subr.mxu0 0.0
      %995 = vmatpush1.msra.mxu0 0.0
      %996 = vmatprep.subr.mxu0 0.0
      %997 = vmatpush1.msra.mxu0 0.0
      %998 = vmatprep.subr.mxu0 0.0
      %999 = vmatpush1.msra.mxu0 0.0
      %1000 = vmatprep.subr.mxu0 0.0
      %1001 = vmatpush1.msra.mxu0 0.0
      %1002 = vmatprep.mubr.f32.mxu0 0.0
      %1003 = vmatmul.mubr.f32.gmra.mrb[0].mxu0 %v794
      %v1004 = vpop.f32.mrb[0].mxu0
      %v1005 = vadd.f32 %v857, %v1004
      %v1006 = vpop.f32.mrb[0].mxu0
      %1007 = vmatprep.mubr.f32.mxu0 0.0
      %1008 = vmatmul.mubr.f32.gmra.mrb[0].mxu0 %v795
      %v1009 = vpop.f32.mrb[0].mxu0
      %v1010 = vadd.f32 %v857, %v1009
      %v1011 = vpop.f32.mrb[0].mxu0
      %1012 = vdwg.mxu0
      %v1013 = vmul.f32 %v930, %v589
      %v1014 = vmul.f32 %v936, %v590
      %v1015 = vadd.f32 %v404, %v1013
      %v1016 = vadd.f32 %v405, %v1014
      %v1017 = vadd.f32 %v1015, %v1005
      %v1018 = vadd.f32 %v1016, %v1010
      %1019 = vst [vmem:[%s395] sm:$0xff] %v1017
      %1020 = vst [vmem:[%s395 + $0x8] sm:$0xff] %v1018
      %v1021 = vmul.f32 %v928, %v523
      %v1022 = vmul.f32 %v934, %v529
      %v1023 = vadd.f32 %v406, %v1021
      %v1024 = vadd.f32 %v409, %v1022
      %v1025 = vmul.f32 %v928, %v535
      %v1026 = vmul.f32 %v934, %v541
      %v1027 = vadd.f32 %v407, %v1025
      %v1028 = vadd.f32 %v410, %v1026
      %v1029 = vmul.f32 %v928, %v547
      %v1030 = vmul.f32 %v934, %v553
      %v1031 = vadd.f32 %v408, %v1029
      %v1032 = vadd.f32 %v411, %v1030
      %1033 = vst [vmem:[%s402] sm:$0xff] %v1023
      %1034 = vst [vmem:[%s402 + $0x8] sm:$0xff] %v1027
      %1035 = vst [vmem:[%s402 + $0x10] sm:$0xff] %v1031
      %1036 = vst [vmem:[%s402 + $0x18] sm:$0xff] %v1024
      %1037 = vst [vmem:[%s402 + $0x20] sm:$0xff] %v1028
      %1038 = vst [vmem:[%s402 + $0x28] sm:$0xff] %v1032
      %s1039 = smul.u32 2, %s22
      %p1040 = scmp.lt.s32.totalorder %s1039, 5
      %s1041 = scalar_select %p1040, %s1039, 5
      %s1042 = smul.addr %s1041, 8
      %s1043 = scalar_lea.vmem %s9, %s1042
      %s1044 = smul.u32 2, %s22
      %p1045 = scmp.lt.s32.totalorder %s1044, 5
      %s1046 = scalar_select %p1045, %s1044, 5
      %s1047 = smul.addr %s1046, 3
      %s1048 = smul.addr %s1047, 8
      %s1049 = scalar_lea.vmem %s10, %s1048
      // Predicated region
      $region57: #{update_layer.1} parent=55 // pred_check
        %p1050 = pneg %p239
      $region58: #{update_layer.1} parent=55 // pred_check_branch
        %1052 = sbr.rel (%p1050) target = $region60
      $region59: #{update_layer.1} parent=55 // pred_region
        %s1053 = smul.u32 2, %s22
      $region60: #{update_layer.1} parent=55 // pred_fallthru
        _
      // Predicated region
      $region61: #{update_layer.1} parent=55 // pred_check
        %p1054 = pneg %p265
      $region62: #{update_layer.1} parent=55 // pred_check_branch
        %1056 = sbr.rel (%p1054) target = $region64
      $region63: #{update_layer.1} parent=55 // pred_region
        %s1057 = smul.u32 2, %s22
      $region64: #{update_layer.1} parent=55 // pred_fallthru
        _
    $region56: #{update_layer.1} parent=5 // pred_fallthru
      _
    %p1058 = scmp.le.s32.totalorder 2, %s17
    // Predicated region
    $region65: #{update_layer.1} parent=5 // pred_check
      %p1059 = pneg %p1058
    $region66: #{update_layer.1} parent=5 // pred_check_branch
      %1061 = sbr.rel (%p1059) target = $region68
    $region67: #{update_layer.1} parent=5 // pred_region
      %s1062 = ssub.s32 %s17, 2
      // Predicated region
      $region69: #{update_layer.1} parent=67 // pred_check
        %p1063 = pneg %p245
      $region70: #{update_layer.1} parent=67 // pred_check_branch
        %1065 = sbr.rel (%p1063) target = $region72
      $region71: #{update_layer.1} parent=67 // pred_region
        %s1066 = smul.u32 2, %s23
        %p1067 = scmp.lt.s32.totalorder %s1066, 5
        %s1068 = scalar_select %p1067, %s1066, 5
        %s1069 = smul.addr %s1068, 8
        %s1070 = scalar_lea.vmem %s9, %s1069
      $region72: #{update_layer.1} parent=67 // pred_fallthru
        _
      // Predicated region
      $region73: #{update_layer.1} parent=67 // pred_check
        %p1071 = pneg %p271
      $region74: #{update_layer.1} parent=67 // pred_check_branch
        %1073 = sbr.rel (%p1071) target = $region76
      $region75: #{update_layer.1} parent=67 // pred_region
        %s1074 = smul.u32 2, %s23
        %p1075 = scmp.lt.s32.totalorder %s1074, 5
        %s1076 = scalar_select %p1075, %s1074, 5
        %s1077 = smul.addr %s1076, 3
        %s1078 = smul.addr %s1077, 8
        %s1079 = scalar_lea.vmem %s10, %s1078
      $region76: #{update_layer.1} parent=67 // pred_fallthru
        _
    $region68: #{update_layer.1} parent=5 // pred_fallthru
      _
  $region6: #{update_layer.1} parent=0 // loop_footer
    %s21 = sadd.s32 1, %s17
  $region7: #{update_layer.1} parent=0 // loop_footer_branch
    %16 = sbr.rel target = $region3
  $region8: #{update_layer.1} parent=0 // loop_exit
    _

</llo_original>
